<compile_context>
chip_gen: v7x
topology: tpu7x:2x2x1
jax: 0.10.0
libtpu: 0.0.40
codegen_flags: <defaults>
</compile_context>

<pallas_src>
import jax
import jax.numpy as jnp
from jax.experimental import pallas as pl
from jax.experimental.pallas import tpu as pltpu

_LANES = 128
_SUBLANES = 8


def _kbm_kernel(params_ref,   # SMEM (6,) f32 (scalar prefetch):
                              #   [front_wb, rear_wb, steer_gain, brake_accel, throt_w, dt]
                in_ref,       # VMEM (7, S, 128) f32 rows: [x, y, yaw, spd, throt, steer, brake]
                out_ref):     # VMEM (4, S, 128) f32 rows: [nx, ny, nyaw, nspd]
    front_wb = params_ref[0]
    rear_wb = params_ref[1]
    steer_gain = params_ref[2]
    brake_accel = params_ref[3]
    throt_w = params_ref[4]
    dt = params_ref[5]

    # Derived scalars on the scalar unit (no per-element divides).
    k = rear_wb / (front_wb + rear_wb)
    dt_over_rear = dt / rear_wb

    x = in_ref[0]            # (S, 128) full-vreg slabs
    y = in_ref[1]
    yaw = in_ref[2]
    spd = in_ref[3]
    throt = in_ref[4]
    steer = in_ref[5]
    brake = in_ref[6]

    # torch .byte() truncates toward zero before comparing to 1.
    accel = jnp.where(jnp.trunc(brake) == 1.0, brake_accel, throt_w * throt)

    # beta = atan(k * tan(wheel)); use sin/cos(atan(t)) identities instead of
    # materializing beta:  cos(beta) = rsqrt(1+t^2), sin(beta) = t * rsqrt(1+t^2).
    t = k * jnp.tan(steer_gain * steer)
    inv = jax.lax.rsqrt(1.0 + t * t)
    cos_b = inv
    sin_b = t * inv

    cy = jnp.cos(yaw)
    sy = jnp.sin(yaw)
    sdt = spd * dt

    # Angle-addition: cos(yaw+beta), sin(yaw+beta).
    out_ref[0] = x + sdt * (cy * cos_b - sy * sin_b)
    out_ref[1] = y + sdt * (sy * cos_b + cy * sin_b)
    out_ref[2] = yaw + spd * dt_over_rear * sin_b
    out_ref[3] = jnp.maximum(spd + accel * dt, 0.0)          # F.relu


def _round_up(x, m):
    return (x + m - 1) // m * m


def kinematic_bicycle_model_wor_packed(slab, params, *, max_rows=512):
    """Packed lane-dense forward.

    slab: (7, S, 128) f32, rows [x, y, yaw, spd, throt, steer, brake], S % 8 == 0.
    params: f32[6] = [front_wb, rear_wb, steer_gain, brake_accel, throt_w, dt].
    Returns (4, S, 128) f32, rows [next_x, next_y, next_yaw, next_spd].

    Use this directly inside rollout loops to keep state in the lane-dense
    layout and avoid wrapper-side HBM layout passes.
    """
    _, s_total, lanes = slab.shape
    assert lanes == _LANES and s_total % _SUBLANES == 0

    # Tile rows: multiple of 8, dividing s_total, capped at max_rows.
    s_tile = min(_round_up(int(max_rows), _SUBLANES), s_total)
    while s_total % s_tile != 0:
        s_tile -= _SUBLANES

    return pl.pallas_call(
        _kbm_kernel,
        out_shape=jax.ShapeDtypeStruct((4, s_total, _LANES), jnp.float32),
        grid_spec=pltpu.PrefetchScalarGridSpec(
            num_scalar_prefetch=1,
            grid=(s_total // s_tile,),
            in_specs=[pl.BlockSpec((7, s_tile, _LANES), lambda i, p: (0, i, 0))],
            out_specs=pl.BlockSpec((4, s_tile, _LANES), lambda i, p: (0, i, 0)),
        ),
        compiler_params=pltpu.CompilerParams(
            dimension_semantics=("parallel",)),
    )(params.astype(jnp.float32), slab)


def kinematic_bicycle_model_wor(locs, yaws, spds, acts, params, *, max_rows=512):
    """Forward pass matching the PyTorch module interface.

    locs (B,2), yaws (B,1), spds (B,1), acts (B,3) float32.
    params = f32[6]: [front_wb, rear_wb, steer_gain, brake_accel, throt_w, dt].
    Returns (next_locs (B,2), next_yaws (B,1), next_spds (B,1)).
    """
    B = locs.shape[0]
    rows_needed = pl.cdiv(B, _LANES)
    s_tile = min(_round_up(int(max_rows), _SUBLANES),
                 _round_up(max(int(rows_needed), 1), _SUBLANES))
    s_total = _round_up(int(rows_needed), s_tile)
    Bp = s_total * _LANES

    # One-time layout plumbing to the lane-dense fused slab (7, S, 128).
    # Padded lanes are zeros -> tan(0)=0, rsqrt(1)=1, brake=0: no NaN/Inf.
    slab = jnp.concatenate(
        [locs.astype(jnp.float32),
         yaws.astype(jnp.float32),
         spds.astype(jnp.float32),
         acts.astype(jnp.float32)], axis=-1).T                # (7, B)
    slab = jnp.pad(slab, ((0, 0), (0, Bp - B)))                # (7, Bp)
    slab = slab.reshape(7, s_total, _LANES)                    # (7, S, 128)

    out = kinematic_bicycle_model_wor_packed(slab, params, max_rows=s_tile)

    out = out.reshape(4, Bp)[:, :B]                            # drop padding
    next_locs = out[0:2, :].T                                  # (B, 2)
    next_yaws = out[2:3, :].T                                  # (B, 1)
    next_spds = out[3:4, :].T                                  # (B, 1)
    return next_locs, next_yaws, next_spds


def reference(locs, yaws, spds, acts, params):
    front_wb, rear_wb, steer_gain, brake_accel, throt_w, dt = [params[i] for i in range(6)]
    throt = acts[:, 0:1]
    steer = acts[:, 1:2]
    brake = acts[:, 2:3].astype(jnp.int32)
    accel = jnp.where(brake == 1, brake_accel, throt_w * throt)
    wheel = steer_gain * steer
    beta = jnp.arctan(rear_wb / (front_wb + rear_wb) * jnp.tan(wheel))
    next_locs = locs + spds * jnp.concatenate(
        [jnp.cos(yaws + beta), jnp.sin(yaws + beta)], -1) * dt
    next_yaws = yaws + spds / rear_wb * jnp.sin(beta) * dt
    next_spds = spds + accel * dt
    return next_locs, next_yaws, jnp.maximum(next_spds, 0.0)


def _make_inputs(key, B):
    k1, k2, k3, k4a, k4b, k4c, k5 = jax.random.split(key, 7)
    locs = jax.random.normal(k1, (B, 2), dtype=jnp.float32) * 5.0
    yaws = jax.random.uniform(k2, (B, 1), dtype=jnp.float32, minval=-3.14, maxval=3.14)
    spds = jax.random.uniform(k3, (B, 1), dtype=jnp.float32, minval=0.0, maxval=10.0)
    throt = jax.random.uniform(k4a, (B, 1), dtype=jnp.float32)
    steer = jax.random.uniform(k4b, (B, 1), dtype=jnp.float32, minval=-0.5, maxval=0.5)
    brake = (jax.random.uniform(k4c, (B, 1)) > 0.7).astype(jnp.float32)
    acts = jnp.concatenate([throt, steer, brake], axis=-1)     # (B, 3)
    # front_wb=1, rear_wb=1, steer_gain=1, brake_accel=0, throt_w ~ U(-1,1), dt=0.25
    throt_w = jax.random.uniform(k5, (), dtype=jnp.float32, minval=-1.0, maxval=1.0)
    params = jnp.array([1.0, 1.0, 1.0, 0.0, float(throt_w), 0.25], dtype=jnp.float32)
    return locs, yaws, spds, acts, params


if __name__ == "__main__":
    key = jax.random.PRNGKey(0)

    # Small case (B=8): one (7, 8, 128) tile, grid = (1,).
    locs, yaws, spds, acts, params = _make_inputs(key, 8)
    nlocs, nyaws, nspds = kinematic_bicycle_model_wor(locs, yaws, spds, acts, params)
    jax.block_until_ready((nlocs, nyaws, nspds))
    rl, ry, rs = reference(locs, yaws, spds, acts, params)
    assert jnp.allclose(nlocs, rl, atol=1e-5), "locs mismatch (B=8)"
    assert jnp.allclose(nyaws, ry, atol=1e-5), "yaws mismatch (B=8)"
    assert jnp.allclose(nspds, rs, atol=1e-5), "spds mismatch (B=8)"

    # Non-multiple-of-128 batch with a forced multi-tile grid:
    # B=1300 -> 11 rows needed -> padded to 16 rows, tile 8 rows, grid (2,).
    locs2, yaws2, spds2, acts2, params2 = _make_inputs(jax.random.PRNGKey(1), 1300)
    nlocs2, nyaws2, nspds2 = kinematic_bicycle_model_wor(
        locs2, yaws2, spds2, acts2, params2, max_rows=8)
    jax.block_until_ready((nlocs2, nyaws2, nspds2))
    rl2, ry2, rs2 = reference(locs2, yaws2, spds2, acts2, params2)
    assert jnp.allclose(nlocs2, rl2, atol=1e-5), "locs mismatch (B=1300)"
    assert jnp.allclose(nyaws2, ry2, atol=1e-5), "yaws mismatch (B=1300)"
    assert jnp.allclose(nspds2, rs2, atol=1e-5), "spds mismatch (B=1300)"

    print("KERNEL_OK")
</pallas_src>

<mosaic_0001>
module attributes {stable_mosaic.version = 11 : i64} {
  func.func @_kbm_kernel(%arg0: i32, %arg1: memref<6xf32, #tpu.memory_space<smem>>, %arg2: memref<7x8x128xf32, #tpu.memory_space<vmem>>, %arg3: memref<4x8x128xf32, #tpu.memory_space<vmem>>) attributes {dimension_semantics = [#tpu.dimension_semantics<parallel>], iteration_bounds = array<i64: 1>, scalar_prefetch = 1 : i64, scratch_operands = 0 : i64, tpu.core_type = #tpu.core_type<tc>, window_params = [{transform_indices = @transform_0, window_bounds = array<i64: 7, 8, 128>}, {transform_indices = @transform_1, window_bounds = array<i64: 4, 8, 128>}]} {
    %c0 = arith.constant 0 : index
    %0 = memref.load %arg1[%c0] : memref<6xf32, #tpu.memory_space<smem>>
    %c1 = arith.constant 1 : index
    %1 = memref.load %arg1[%c1] : memref<6xf32, #tpu.memory_space<smem>>
    %c2 = arith.constant 2 : index
    %2 = memref.load %arg1[%c2] : memref<6xf32, #tpu.memory_space<smem>>
    %c3 = arith.constant 3 : index
    %3 = memref.load %arg1[%c3] : memref<6xf32, #tpu.memory_space<smem>>
    %c4 = arith.constant 4 : index
    %4 = memref.load %arg1[%c4] : memref<6xf32, #tpu.memory_space<smem>>
    %c5 = arith.constant 5 : index
    %5 = memref.load %arg1[%c5] : memref<6xf32, #tpu.memory_space<smem>>
    %6 = arith.addf %0, %1 : f32
    %7 = arith.divf %1, %6 : f32
    %8 = arith.divf %5, %1 : f32
    %c0_0 = arith.constant 0 : index
    %c0_1 = arith.constant 0 : index
    %c0_2 = arith.constant 0 : index
    %9 = vector.load %arg2[%c0_0, %c0_1, %c0_2] : memref<7x8x128xf32, #tpu.memory_space<vmem>>, vector<1x8x128xf32>
    %10 = vector.shape_cast %9 : vector<1x8x128xf32> to vector<8x128xf32>
    %c1_3 = arith.constant 1 : index
    %c0_4 = arith.constant 0 : index
    %c0_5 = arith.constant 0 : index
    %11 = vector.load %arg2[%c1_3, %c0_4, %c0_5] : memref<7x8x128xf32, #tpu.memory_space<vmem>>, vector<1x8x128xf32>
    %12 = vector.shape_cast %11 : vector<1x8x128xf32> to vector<8x128xf32>
    %c2_6 = arith.constant 2 : index
    %c0_7 = arith.constant 0 : index
    %c0_8 = arith.constant 0 : index
    %13 = vector.load %arg2[%c2_6, %c0_7, %c0_8] : memref<7x8x128xf32, #tpu.memory_space<vmem>>, vector<1x8x128xf32>
    %14 = vector.shape_cast %13 : vector<1x8x128xf32> to vector<8x128xf32>
    %c3_9 = arith.constant 3 : index
    %c0_10 = arith.constant 0 : index
    %c0_11 = arith.constant 0 : index
    %15 = vector.load %arg2[%c3_9, %c0_10, %c0_11] : memref<7x8x128xf32, #tpu.memory_space<vmem>>, vector<1x8x128xf32>
    %16 = vector.shape_cast %15 : vector<1x8x128xf32> to vector<8x128xf32>
    %c4_12 = arith.constant 4 : index
    %c0_13 = arith.constant 0 : index
    %c0_14 = arith.constant 0 : index
    %17 = vector.load %arg2[%c4_12, %c0_13, %c0_14] : memref<7x8x128xf32, #tpu.memory_space<vmem>>, vector<1x8x128xf32>
    %18 = vector.shape_cast %17 : vector<1x8x128xf32> to vector<8x128xf32>
    %c5_15 = arith.constant 5 : index
    %c0_16 = arith.constant 0 : index
    %c0_17 = arith.constant 0 : index
    %19 = vector.load %arg2[%c5_15, %c0_16, %c0_17] : memref<7x8x128xf32, #tpu.memory_space<vmem>>, vector<1x8x128xf32>
    %20 = vector.shape_cast %19 : vector<1x8x128xf32> to vector<8x128xf32>
    %c6 = arith.constant 6 : index
    %c0_18 = arith.constant 0 : index
    %c0_19 = arith.constant 0 : index
    %21 = vector.load %arg2[%c6, %c0_18, %c0_19] : memref<7x8x128xf32, #tpu.memory_space<vmem>>, vector<1x8x128xf32>
    %22 = vector.shape_cast %21 : vector<1x8x128xf32> to vector<8x128xf32>
    %cst = arith.constant 0.000000e+00 : f32
    %23 = vector.broadcast %cst : f32 to vector<8x128xf32>
    %24 = arith.cmpf olt, %22, %23 : vector<8x128xf32>
    %25 = math.ceil %22 : vector<8x128xf32>
    %26 = math.floor %22 : vector<8x128xf32>
    %27 = arith.select %24, %25, %26 : vector<8x128xi1>, vector<8x128xf32>
    %cst_20 = arith.constant 1.000000e+00 : f32
    %28 = vector.broadcast %cst_20 : f32 to vector<8x128xf32>
    %29 = arith.cmpf oeq, %27, %28 : vector<8x128xf32>
    %30 = vector.broadcast %4 : f32 to vector<8x128xf32>
    %31 = arith.mulf %30, %18 : vector<8x128xf32>
    %32 = vector.broadcast %3 : f32 to vector<8x128xf32>
    %33 = arith.select %29, %32, %31 : vector<8x128xi1>, vector<8x128xf32>
    %34 = vector.broadcast %2 : f32 to vector<8x128xf32>
    %35 = arith.mulf %34, %20 : vector<8x128xf32>
    %36 = math.tan %35 : vector<8x128xf32>
    %37 = vector.broadcast %7 : f32 to vector<8x128xf32>
    %38 = arith.mulf %37, %36 : vector<8x128xf32>
    %39 = arith.mulf %38, %38 : vector<8x128xf32>
    %cst_21 = arith.constant 1.000000e+00 : f32
    %40 = vector.broadcast %cst_21 : f32 to vector<8x128xf32>
    %41 = arith.addf %40, %39 : vector<8x128xf32>
    %42 = math.rsqrt %41 : vector<8x128xf32>
    %43 = arith.mulf %38, %42 : vector<8x128xf32>
    %44 = math.cos %14 : vector<8x128xf32>
    %45 = math.sin %14 : vector<8x128xf32>
    %46 = vector.broadcast %5 : f32 to vector<8x128xf32>
    %47 = arith.mulf %16, %46 : vector<8x128xf32>
    %48 = arith.mulf %44, %42 : vector<8x128xf32>
    %49 = arith.mulf %45, %43 : vector<8x128xf32>
    %50 = arith.subf %48, %49 : vector<8x128xf32>
    %51 = arith.mulf %47, %50 : vector<8x128xf32>
    %52 = arith.addf %10, %51 : vector<8x128xf32>
    %c0_22 = arith.constant 0 : index
    %c0_23 = arith.constant 0 : index
    %c0_24 = arith.constant 0 : index
    %53 = vector.load %arg3[%c0_22, %c0_23, %c0_24] : memref<4x8x128xf32, #tpu.memory_space<vmem>>, vector<1x8x128xf32>
    %54 = vector.shape_cast %53 : vector<1x8x128xf32> to vector<8x128xf32>
    %55 = vector.shape_cast %52 : vector<8x128xf32> to vector<1x8x128xf32>
    tpu.vector_store %arg3[%c0_22, %c0_23, %c0_24], %55 {strides = array<i32>} : memref<4x8x128xf32, #tpu.memory_space<vmem>>, vector<1x8x128xf32>,
    %56 = arith.mulf %45, %42 : vector<8x128xf32>
    %57 = arith.mulf %44, %43 : vector<8x128xf32>
    %58 = arith.addf %56, %57 : vector<8x128xf32>
    %59 = arith.mulf %47, %58 : vector<8x128xf32>
    %60 = arith.addf %12, %59 : vector<8x128xf32>
    %c1_25 = arith.constant 1 : index
    %c0_26 = arith.constant 0 : index
    %c0_27 = arith.constant 0 : index
    %61 = vector.load %arg3[%c1_25, %c0_26, %c0_27] : memref<4x8x128xf32, #tpu.memory_space<vmem>>, vector<1x8x128xf32>
    %62 = vector.shape_cast %61 : vector<1x8x128xf32> to vector<8x128xf32>
    %63 = vector.shape_cast %60 : vector<8x128xf32> to vector<1x8x128xf32>
    tpu.vector_store %arg3[%c1_25, %c0_26, %c0_27], %63 {strides = array<i32>} : memref<4x8x128xf32, #tpu.memory_space<vmem>>, vector<1x8x128xf32>,
    %64 = vector.broadcast %8 : f32 to vector<8x128xf32>
    %65 = arith.mulf %16, %64 : vector<8x128xf32>
    %66 = arith.mulf %65, %43 : vector<8x128xf32>
    %67 = arith.addf %14, %66 : vector<8x128xf32>
    %c2_28 = arith.constant 2 : index
    %c0_29 = arith.constant 0 : index
    %c0_30 = arith.constant 0 : index
    %68 = vector.load %arg3[%c2_28, %c0_29, %c0_30] : memref<4x8x128xf32, #tpu.memory_space<vmem>>, vector<1x8x128xf32>
    %69 = vector.shape_cast %68 : vector<1x8x128xf32> to vector<8x128xf32>
    %70 = vector.shape_cast %67 : vector<8x128xf32> to vector<1x8x128xf32>
    tpu.vector_store %arg3[%c2_28, %c0_29, %c0_30], %70 {strides = array<i32>} : memref<4x8x128xf32, #tpu.memory_space<vmem>>, vector<1x8x128xf32>,
    %71 = vector.broadcast %5 : f32 to vector<8x128xf32>
    %72 = arith.mulf %33, %71 : vector<8x128xf32>
    %73 = arith.addf %16, %72 : vector<8x128xf32>
    %cst_31 = arith.constant 0.000000e+00 : f32
    %74 = vector.broadcast %cst_31 : f32 to vector<8x128xf32>
    %75 = arith.maximumf %73, %74 : vector<8x128xf32>
    %c3_32 = arith.constant 3 : index
    %c0_33 = arith.constant 0 : index
    %c0_34 = arith.constant 0 : index
    %76 = vector.load %arg3[%c3_32, %c0_33, %c0_34] : memref<4x8x128xf32, #tpu.memory_space<vmem>>, vector<1x8x128xf32>
    %77 = vector.shape_cast %76 : vector<1x8x128xf32> to vector<8x128xf32>
    %78 = vector.shape_cast %75 : vector<8x128xf32> to vector<1x8x128xf32>
    tpu.vector_store %arg3[%c3_32, %c0_33, %c0_34], %78 {strides = array<i32>} : memref<4x8x128xf32, #tpu.memory_space<vmem>>, vector<1x8x128xf32>,
    return
  }
  func.func @transform_0(%arg0: i32, %arg1: memref<6xf32, #tpu.memory_space<smem>>) -> (i32, i32, i32) {
    %c0_i32 = arith.constant 0 : i32
    %c0_i32_0 = arith.constant 0 : i32
    %c0_i32_1 = arith.constant 0 : i32
    return %c0_i32, %arg0, %c0_i32_0 : i32, i32, i32
  }
  func.func @transform_1(%arg0: i32, %arg1: memref<6xf32, #tpu.memory_space<smem>>) -> (i32, i32, i32) {
    %c0_i32 = arith.constant 0 : i32
    %c0_i32_0 = arith.constant 0 : i32
    %c0_i32_1 = arith.constant 0 : i32
    return %c0_i32, %arg0, %c0_i32_0 : i32, i32, i32
  }
}

</mosaic_0001>

<llo_original>
// kernel: tpu_custom_call.1
$region0: #{tpu_custom_call.1}
  #allocation0 [shape = 'u32[]', space=smem, size = 0x4, offset = 0x4, fixed_abs, tag = 'smem constant byte address 0x4 - core index']
  #allocation1 [shape = 'u32[144,128]{1,0:T(1,128)}', space=vmem, size = 0x12000, scoped, tag = 'internal scratch']
  #allocation2 [shape = 's32[1]{0}', space=sflag, size = 0x4, scoped, tag = 'scoped memory for tpu_custom_call.1']
  #allocation3 [shape = 'u8[512]{0}', space=smem, size = 0x200, scoped, tag = 'prefetched SMEM operand 0']
  %s0 = inlined_call_operand.hbm [shape: f32[6], index: 0, kind: input, shape index: {}]
  %s1 = inlined_call_operand.hbm [shape: f32[7,8,128], index: 1, kind: input, shape index: {}]
  %s2 = inlined_call_operand.hbm [shape: f32[4,8,128], index: 2, kind: output, shape index: {}]
  %s3 = sld [smem:[#allocation0]]
  $region18: #{tpu_custom_call.1} parent=0
    _
  %s5 = ssub.s32 1, %s3
  %s6 = scalar_select 0, %s5, %s3
  %8 = dma.hbm_to_smem %s0, 16, [#allocation3], [#allocation2]
  %9 = dma.done [#allocation2], 16
  %10 = sfence
  $region1: #{tpu_custom_call.1} parent=0
    #allocation4 [shape = 'u8[28672]{0}', space=vmem, size = 0x7000, scoped, tag = 'input window, operand 1, single buffered']
    #allocation5 [shape = 's32[1]{0}', space=sflag, size = 0x4, scoped, tag = 'scoped memory for tpu_custom_call.1']
    #allocation6 [shape = 's32[1]{0}', space=sflag, size = 0x4, scoped, tag = 'scoped memory for tpu_custom_call.1']
    #allocation7 [shape = 'u8[16384]{0}', space=vmem, size = 0x4000, scoped, tag = 'output window, operand 0, single buffered']
    %11 = vsyncpa [#allocation5], 0
    %12 = vsyncpa [#allocation6], 0
    // Predicated region
    $region2: #{tpu_custom_call.1} parent=1 // pred_check
      _
    $region3: #{tpu_custom_call.1} parent=1 // pred_check_branch
      %14 = sbr.rel (0) target = $region5
    $region4: #{tpu_custom_call.1} parent=1 // pred_region
      %s16 = ssub.s32 896, 896
      %17 = vsyncadd [#allocation5], %s16
      %s18 = sshll.u32 [#allocation4], 4
      %s19 = int_to_ptr.vmem [resolvable:$true] %s18
      %24 = dma.hbm_to_vmem [thread:$0]  %s1, 896, %s19, [#allocation5], 128, 128, 8
    $region5: #{tpu_custom_call.1} parent=1 // pred_fallthru
      _
    // Predicated region
    $region6: #{tpu_custom_call.1} parent=1 // pred_check
      _
    $region7: #{tpu_custom_call.1} parent=1 // pred_check_branch
      %26 = sbr.rel (0) target = $region9
    $region8: #{tpu_custom_call.1} parent=1 // pred_region
      %27 = dma.done [#allocation5], 896
    $region9: #{tpu_custom_call.1} parent=1 // pred_fallthru
      _
    %s28 = sld [smem:[#allocation3]]
    %s29 = sld [smem:[#allocation3 + $0x1]]
    %s30 = sld [smem:[#allocation3 + $0x2]]
    %s31 = sld [smem:[#allocation3 + $0x3]]
    %s32 = sld [smem:[#allocation3 + $0x4]]
    %s33 = sld [smem:[#allocation3 + $0x5]]
    %s34 = sadd.f32 %s28, %s29
    %v35 = vstv %s34
    %v36 = vrcp.pop %v35
    %s37 = vtos %v36
    %s38 = smul.f32 %s29, %s37
    %v39 = vstv %s29
    %v40 = vrcp.pop %v39
    %s41 = vtos %v40
    %s42 = smul.f32 %s33, %s41
    %v43 = vld [vmem:[#allocation4] sm:$0xff]
    %s44 = scalar_lea.vmem [#allocation4], 8
    %v45 = vld [vmem:[%s44] sm:$0xff]
    %s46 = scalar_lea.vmem [#allocation4], 16
    %v47 = vld [vmem:[%s46] sm:$0xff]
    %s48 = scalar_lea.vmem [#allocation4], 24
    %v49 = vld [vmem:[%s48] sm:$0xff]
    %s50 = scalar_lea.vmem [#allocation4], 32
    %v51 = vld [vmem:[%s50] sm:$0xff]
    %s52 = scalar_lea.vmem [#allocation4], 40
    %v53 = vld [vmem:[%s52] sm:$0xff]
    %s54 = scalar_lea.vmem [#allocation4], 48
    %v55 = vld [vmem:[%s54] sm:$0xff]
    %vm56 = vcmp.lt.f32.partialorder %v55, 0.0
    %v57 = vceil.f32 %v55
    %v58 = vfloor.f32 %v55
    %v59 = vsel %vm56, %v57, %v58
    %vm60 = vcmp.eq.f32.partialorder %v59, 1.0
    %v61 = vstv %s32
    %v62 = vmul.f32 %v61, %v51
    %v63 = vstv %s31
    %v64 = vsel %vm60, %v63, %v62
    %v65 = vstv %s30
    %v66 = vmul.f32 %v65, %v53
    %v67 = vand.u32 2147483647, %v66
    %vm68 = vcmp.le.f32.partialorder %v67, 0.7853982
    %vm69 = vcmp.lt.s32.totalorder %v66, 0
    %v70 = vand.u32 %v66, 2139095040
    %v71 = vshrl.u32 %v70, 23
    %v72 = vsub.s32 %v71, 127
    %v73 = vand.u32 2147483647, %v66
    %v74 = vand.u32 %v73, 8388607
    %v75 = vor.u32 %v74, 8388608
    %v76 = vsub.s32 0, %v75
    %v77 = vadd.s32 %v72, 1
    %vm78 = vcmp.gt.s32.totalorder %v77, 0
    %v79 = vsel %vm78, %v77, 0
    %v80 = vshrl.u32 %v79, 5
    %v81 = vand.u32 %v79, 31
    %v82 = vsub.s32 32, %v81
    %v83 = vshrl.u32 683565275, %v82
    %v84 = vshll.u32 683565275, %v81
    %v85 = vshrl.u32 2475754826, %v82
    %v86 = vor.u32 %v84, %v85
    %v87 = vshll.u32 2475754826, %v81
    %v88 = vshrl.u32 2131351028, %v82
    %v89 = vor.u32 %v87, %v88
    %v90 = vshll.u32 2131351028, %v81
    %v91 = vshrl.u32 2102212464, %v82
    %v92 = vor.u32 %v90, %v91
    %v93 = vshll.u32 2102212464, %v81
    %v94 = vshrl.u32 920167782, %v82
    %v95 = vor.u32 %v93, %v94
    %v96 = vshll.u32 920167782, %v81
    %v97 = vshrl.u32 1326507024, %v82
    %v98 = vor.u32 %v96, %v97
    %vm99 = vcmp.lt.s32.totalorder %v80, 1
    %vm100 = vcmp.lt.s32.totalorder %v80, 2
    %vm101 = vcmp.lt.s32.totalorder %v80, 3
    %vm102 = vcmp.lt.s32.totalorder %v80, 4
    %v103 = vsel %vm99, %v83, %v86
    %v104 = vsel %vm102, %v92, 2102212464
    %v105 = vsel %vm101, %v89, %v104
    %v106 = vsel %vm100, %v103, %v105
    %v107 = vsel %vm99, %v86, %v89
    %v108 = vsel %vm102, %v95, 920167782
    %v109 = vsel %vm101, %v92, %v108
    %v110 = vsel %vm100, %v107, %v109
    %v111 = vsel %vm99, %v89, %v92
    %v112 = vsel %vm102, %v98, 1326507024
    %v113 = vsel %vm101, %v95, %v112
    %v114 = vsel %vm100, %v111, %v113
    %v115 = vshll.u32 %v75, 8
    %v116 = vmul.u32.u64.compose %v115, %v114
    %v117 = vextract.low.u32 %v116
    %v118 = vextract.high.u32 %v116
    %v119 = vmul.u32.u64.compose %v115, %v110
    %v120 = vextract.low.u32 %v119
    %v121 = vextract.high.u32 %v119
    %v122 = vmul.u32 %v115, %v106
    %v123 = vadd.s32 %v118, %v120
    %vm124 = vc.u32 %v118, %v120
    %v125 = vadd.s32 %v121, 1
    %v126 = vsel %vm124, %v125, %v121
    %v127 = vadd.s32 %v122, %v126
    %v128 = vadd.s32 %v127, 536870912
    %v129 = vshrl.u32 %v128, 30
    %v130 = vshll.u32 %v129, 30
    %v131 = vsub.s32 %v127, %v130
    %vm132 = vcmp.lt.s32.totalorder %v131, 0
    %v133 = vsub.s32 0, %v131
    %v134 = vsel %vm132, %v133, %v131
    %v135 = vclz %v134
    %v136 = vsub.s32 %v135, 2
    %vm137 = vcmp.gt.s32.totalorder 0, %v136
    %v138 = vsel %vm137, 0, %v136
    %v139 = vsub.s32 32, %v138
    %v140 = vshll.u32 %v131, %v138
    %v141 = vshrl.u32 %v123, %v139
    %v142 = vor.u32 %v140, %v141
    %v143 = vsub.s32 4294967266, %v138
    %v144 = vadd.s32 %v143, 127
    %v145 = vshll.u32 %v144, 23
    %v146 = vor.u32 4788187, %v145
    %v147 = vand.u32 2147483647, %v146
    %v149 = vcvt.s32.f32 %v142
    %v150 = vmul.f32 %v149, %v147
    %v151 = vxor.u32 %v150, 2147483648
    %v152 = vsel %vm69, %v151, %v150
    %v153 = vsub.s32 4, %v129
    %v154 = vsel %vm69, %v153, %v129
    %v155 = vsel %vm68, %v66, %v152
    %v156 = vsel %vm68, 0, %v154
    %v157 = vcosq.f32.pop %v155
    %v158 = vsinq.f32.pop %v155
    %vm159 = vweird.f32 %v66
    %v160 = vand.u32 %v156, 3
    %v161 = vadd.s32 %v156, 3
    %v162 = vand.u32 %v161, 3
    %vm163 = vcmp.lt.s32.totalorder %v160, 2
    %vm164 = vcmp.eq.s32.totalorder %v160, 0
    %v165 = vxor.u32 %v158, 2147483648
    %v166 = vsel %vm164, %v157, %v165
    %vm167 = vcmp.eq.s32.totalorder %v160, 2
    %v168 = vxor.u32 %v157, 2147483648
    %v169 = vsel %vm167, %v168, %v158
    %v170 = vsel %vm163, %v166, %v169
    %vm171 = vcmp.lt.s32.totalorder %v162, 2
    %vm172 = vcmp.eq.s32.totalorder %v162, 0
    %v173 = vxor.u32 %v158, 2147483648
    %v174 = vsel %vm172, %v157, %v173
    %vm175 = vcmp.eq.s32.totalorder %v162, 2
    %v176 = vxor.u32 %v157, 2147483648
    %v177 = vsel %vm175, %v176, %v158
    %v178 = vsel %vm171, %v174, %v177
    %v179 = vrcp.pop %v170
    %v180 = vmul.f32 %v178, %v179
    %v181 = vsel %vm159, nan, %v180
    %v182 = vstv %s38
    %v183 = vmul.f32 %v182, %v181
    %v184 = vmul.f32 %v183, %v183
    %v185 = vadd.f32 %v184, 1.0
    %v186 = vrsqrt.pop %v185
    %v187 = vmul.f32 %v183, %v186
    %v188 = vand.u32 2147483647, %v47
    %vm189 = vcmp.le.f32.partialorder %v188, 0.7853982
    %vm190 = vcmp.lt.s32.totalorder %v47, 0
    %v191 = vand.u32 %v47, 2139095040
    %v192 = vshrl.u32 %v191, 23
    %v193 = vsub.s32 %v192, 127
    %v194 = vand.u32 2147483647, %v47
    %v195 = vand.u32 %v194, 8388607
    %v196 = vor.u32 %v195, 8388608
    %v197 = vsub.s32 0, %v196
    %v198 = vadd.s32 %v193, 1
    %vm199 = vcmp.gt.s32.totalorder %v198, 0
    %v200 = vsel %vm199, %v198, 0
    %v201 = vshrl.u32 %v200, 5
    %v202 = vand.u32 %v200, 31
    %v203 = vsub.s32 32, %v202
    %v204 = vshrl.u32 683565275, %v203
    %v205 = vshll.u32 683565275, %v202
    %v206 = vshrl.u32 2475754826, %v203
    %v207 = vor.u32 %v205, %v206
    %v208 = vshll.u32 2475754826, %v202
    %v209 = vshrl.u32 2131351028, %v203
    %v210 = vor.u32 %v208, %v209
    %v211 = vshll.u32 2131351028, %v202
    %v212 = vshrl.u32 2102212464, %v203
    %v213 = vor.u32 %v211, %v212
    %v214 = vshll.u32 2102212464, %v202
    %v215 = vshrl.u32 920167782, %v203
    %v216 = vor.u32 %v214, %v215
    %v217 = vshll.u32 920167782, %v202
    %v218 = vshrl.u32 1326507024, %v203
    %v219 = vor.u32 %v217, %v218
    %vm220 = vcmp.lt.s32.totalorder %v201, 1
    %vm221 = vcmp.lt.s32.totalorder %v201, 2
    %vm222 = vcmp.lt.s32.totalorder %v201, 3
    %vm223 = vcmp.lt.s32.totalorder %v201, 4
    %v224 = vsel %vm220, %v204, %v207
    %v225 = vsel %vm223, %v213, 2102212464
    %v226 = vsel %vm222, %v210, %v225
    %v227 = vsel %vm221, %v224, %v226
    %v228 = vsel %vm220, %v207, %v210
    %v229 = vsel %vm223, %v216, 920167782
    %v230 = vsel %vm222, %v213, %v229
    %v231 = vsel %vm221, %v228, %v230
    %v232 = vsel %vm220, %v210, %v213
    %v233 = vsel %vm223, %v219, 1326507024
    %v234 = vsel %vm222, %v216, %v233
    %v235 = vsel %vm221, %v232, %v234
    %v236 = vshll.u32 %v196, 8
    %v237 = vmul.u32.u64.compose %v236, %v235
    %v238 = vextract.low.u32 %v237
    %v239 = vextract.high.u32 %v237
    %v240 = vmul.u32.u64.compose %v236, %v231
    %v241 = vextract.low.u32 %v240
    %v242 = vextract.high.u32 %v240
    %v243 = vmul.u32 %v236, %v227
    %v244 = vadd.s32 %v239, %v241
    %vm245 = vc.u32 %v239, %v241
    %v246 = vadd.s32 %v242, 1
    %v247 = vsel %vm245, %v246, %v242
    %v248 = vadd.s32 %v243, %v247
    %v249 = vadd.s32 %v248, 536870912
    %v250 = vshrl.u32 %v249, 30
    %v251 = vshll.u32 %v250, 30
    %v252 = vsub.s32 %v248, %v251
    %vm253 = vcmp.lt.s32.totalorder %v252, 0
    %v254 = vsub.s32 0, %v252
    %v255 = vsel %vm253, %v254, %v252
    %v256 = vclz %v255
    %v257 = vsub.s32 %v256, 2
    %vm258 = vcmp.gt.s32.totalorder 0, %v257
    %v259 = vsel %vm258, 0, %v257
    %v260 = vsub.s32 32, %v259
    %v261 = vshll.u32 %v252, %v259
    %v262 = vshrl.u32 %v244, %v260
    %v263 = vor.u32 %v261, %v262
    %v264 = vsub.s32 4294967266, %v259
    %v265 = vadd.s32 %v264, 127
    %v266 = vshll.u32 %v265, 23
    %v267 = vor.u32 4788187, %v266
    %v268 = vand.u32 2147483647, %v267
    %v270 = vcvt.s32.f32 %v263
    %v271 = vmul.f32 %v270, %v268
    %v272 = vxor.u32 %v271, 2147483648
    %v273 = vsel %vm190, %v272, %v271
    %v274 = vsub.s32 4, %v250
    %v275 = vsel %vm190, %v274, %v250
    %v276 = vsel %vm189, %v47, %v273
    %v277 = vsel %vm189, 0, %v275
    %v278 = vcosq.f32.pop %v276
    %v279 = vsinq.f32.pop %v276
    %vm280 = vweird.f32 %v47
    %v281 = vand.u32 %v277, 3
    %vm282 = vcmp.lt.s32.totalorder %v281, 2
    %vm283 = vcmp.eq.s32.totalorder %v281, 0
    %v284 = vxor.u32 %v279, 2147483648
    %v285 = vsel %vm283, %v278, %v284
    %vm286 = vcmp.eq.s32.totalorder %v281, 2
    %v287 = vxor.u32 %v278, 2147483648
    %v288 = vsel %vm286, %v287, %v279
    %v289 = vsel %vm282, %v285, %v288
    %v290 = vsel %vm280, nan, %v289
    %v291 = vand.u32 2147483647, %v47
    %vm292 = vcmp.le.f32.partialorder %v291, 0.7853982
    %vm293 = vcmp.lt.s32.totalorder %v47, 0
    %v294 = vand.u32 %v47, 2139095040
    %v295 = vshrl.u32 %v294, 23
    %v296 = vsub.s32 %v295, 127
    %v297 = vand.u32 2147483647, %v47
    %v298 = vand.u32 %v297, 8388607
    %v299 = vor.u32 %v298, 8388608
    %v300 = vsub.s32 0, %v299
    %v301 = vadd.s32 %v296, 1
    %vm302 = vcmp.gt.s32.totalorder %v301, 0
    %v303 = vsel %vm302, %v301, 0
    %v304 = vshrl.u32 %v303, 5
    %v305 = vand.u32 %v303, 31
    %v306 = vsub.s32 32, %v305
    %v307 = vshrl.u32 683565275, %v306
    %v308 = vshll.u32 683565275, %v305
    %v309 = vshrl.u32 2475754826, %v306
    %v310 = vor.u32 %v308, %v309
    %v311 = vshll.u32 2475754826, %v305
    %v312 = vshrl.u32 2131351028, %v306
    %v313 = vor.u32 %v311, %v312
    %v314 = vshll.u32 2131351028, %v305
    %v315 = vshrl.u32 2102212464, %v306
    %v316 = vor.u32 %v314, %v315
    %v317 = vshll.u32 2102212464, %v305
    %v318 = vshrl.u32 920167782, %v306
    %v319 = vor.u32 %v317, %v318
    %v320 = vshll.u32 920167782, %v305
    %v321 = vshrl.u32 1326507024, %v306
    %v322 = vor.u32 %v320, %v321
    %vm323 = vcmp.lt.s32.totalorder %v304, 1
    %vm324 = vcmp.lt.s32.totalorder %v304, 2
    %vm325 = vcmp.lt.s32.totalorder %v304, 3
    %vm326 = vcmp.lt.s32.totalorder %v304, 4
    %v327 = vsel %vm323, %v307, %v310
    %v328 = vsel %vm326, %v316, 2102212464
    %v329 = vsel %vm325, %v313, %v328
    %v330 = vsel %vm324, %v327, %v329
    %v331 = vsel %vm323, %v310, %v313
    %v332 = vsel %vm326, %v319, 920167782
    %v333 = vsel %vm325, %v316, %v332
    %v334 = vsel %vm324, %v331, %v333
    %v335 = vsel %vm323, %v313, %v316
    %v336 = vsel %vm326, %v322, 1326507024
    %v337 = vsel %vm325, %v319, %v336
    %v338 = vsel %vm324, %v335, %v337
    %v339 = vshll.u32 %v299, 8
    %v340 = vmul.u32.u64.compose %v339, %v338
    %v341 = vextract.low.u32 %v340
    %v342 = vextract.high.u32 %v340
    %v343 = vmul.u32.u64.compose %v339, %v334
    %v344 = vextract.low.u32 %v343
    %v345 = vextract.high.u32 %v343
    %v346 = vmul.u32 %v339, %v330
    %v347 = vadd.s32 %v342, %v344
    %vm348 = vc.u32 %v342, %v344
    %v349 = vadd.s32 %v345, 1
    %v350 = vsel %vm348, %v349, %v345
    %v351 = vadd.s32 %v346, %v350
    %v352 = vadd.s32 %v351, 536870912
    %v353 = vshrl.u32 %v352, 30
    %v354 = vshll.u32 %v353, 30
    %v355 = vsub.s32 %v351, %v354
    %vm356 = vcmp.lt.s32.totalorder %v355, 0
    %v357 = vsub.s32 0, %v355
    %v358 = vsel %vm356, %v357, %v355
    %v359 = vclz %v358
    %v360 = vsub.s32 %v359, 2
    %vm361 = vcmp.gt.s32.totalorder 0, %v360
    %v362 = vsel %vm361, 0, %v360
    %v363 = vsub.s32 32, %v362
    %v364 = vshll.u32 %v355, %v362
    %v365 = vshrl.u32 %v347, %v363
    %v366 = vor.u32 %v364, %v365
    %v367 = vsub.s32 4294967266, %v362
    %v368 = vadd.s32 %v367, 127
    %v369 = vshll.u32 %v368, 23
    %v370 = vor.u32 4788187, %v369
    %v371 = vand.u32 2147483647, %v370
    %v373 = vcvt.s32.f32 %v366
    %v374 = vmul.f32 %v373, %v371
    %v375 = vxor.u32 %v374, 2147483648
    %v376 = vsel %vm293, %v375, %v374
    %v377 = vsub.s32 4, %v353
    %v378 = vsel %vm293, %v377, %v353
    %v379 = vsel %vm292, %v47, %v376
    %v380 = vsel %vm292, 0, %v378
    %v381 = vcosq.f32.pop %v379
    %v382 = vsinq.f32.pop %v379
    %vm383 = vweird.f32 %v47
    %v384 = vadd.s32 %v380, 3
    %v385 = vand.u32 %v384, 3
    %vm386 = vcmp.lt.s32.totalorder %v385, 2
    %vm387 = vcmp.eq.s32.totalorder %v385, 0
    %v388 = vxor.u32 %v382, 2147483648
    %v389 = vsel %vm387, %v381, %v388
    %vm390 = vcmp.eq.s32.totalorder %v385, 2
    %v391 = vxor.u32 %v381, 2147483648
    %v392 = vsel %vm390, %v391, %v382
    %v393 = vsel %vm386, %v389, %v392
    %v394 = vsel %vm383, nan, %v393
    %v395 = vstv %s33
    %v396 = vmul.f32 %v49, %v395
    %v397 = vmul.f32 %v290, %v186
    %v398 = vmul.f32 %v394, %v187
    %v399 = vsub.f32 %v397, %v398
    %v400 = vmul.f32 %v396, %v399
    %v401 = vadd.f32 %v43, %v400
    %402 = vst [vmem:[#allocation7] sm:$0xff] %v401
    %v403 = vmul.f32 %v394, %v186
    %v404 = vmul.f32 %v290, %v187
    %v405 = vadd.f32 %v403, %v404
    %v406 = vmul.f32 %v396, %v405
    %v407 = vadd.f32 %v45, %v406
    %s408 = scalar_lea.vmem [#allocation7], 8
    %409 = vst [vmem:[%s408] sm:$0xff] %v407
    %v410 = vstv %s42
    %v411 = vmul.f32 %v49, %v410
    %v412 = vmul.f32 %v411, %v187
    %v413 = vadd.f32 %v47, %v412
    %s414 = scalar_lea.vmem [#allocation7], 16
    %415 = vst [vmem:[%s414] sm:$0xff] %v413
    %v416 = vmul.f32 %v64, %v395
    %v417 = vadd.f32 %v49, %v416
    %v418 = vmax.f32 %v417, 0.0
    %s419 = scalar_lea.vmem [#allocation7], 24
    %420 = vst [vmem:[%s419] sm:$0xff] %v418
    // Predicated region
    $region10: #{tpu_custom_call.1} parent=1 // pred_check
      _
    $region11: #{tpu_custom_call.1} parent=1 // pred_check_branch
      %422 = sbr.rel (0) target = $region13
    $region12: #{tpu_custom_call.1} parent=1 // pred_region
      %s424 = ssub.s32 512, 512
      %425 = vsyncadd [#allocation6], %s424
      %s426 = sshll.u32 [#allocation7], 4
      %s427 = int_to_ptr.vmem [resolvable:$true] %s426
      %432 = dma.vmem_to_hbm [thread:$0]  %s427, 512, %s2, [#allocation6], 128, 128, 8
    $region13: #{tpu_custom_call.1} parent=1 // pred_fallthru
      _
    // Predicated region
    $region14: #{tpu_custom_call.1} parent=1 // pred_check
      _
    $region15: #{tpu_custom_call.1} parent=1 // pred_check_branch
      %434 = sbr.rel (0) target = $region17
    $region16: #{tpu_custom_call.1} parent=1 // pred_region
      %435 = dma.done [#allocation6], 512
    $region17: #{tpu_custom_call.1} parent=1 // pred_fallthru
      _
    %436 = vsyncpa [#allocation5], 1
    %437 = vsyncpa [#allocation6], 1

</llo_original>
